<compile_context>
chip_gen: v5e
topology: v5e:2x2
jax: 0.10.0
libtpu: 0.0.40
codegen_flags: <defaults>
</compile_context>

<pallas_src>
import functools
import math

import jax
import jax.numpy as jnp
from jax.experimental import pallas as pl
from jax.experimental.pallas import tpu as pltpu

LN_EPS = 1e-5


def _prenorm_linear_kernel(x_ref, w_ref, b_ref, o_ref, xn_ref):
    # x_ref : (tr, D)   input rows (full feature width)
    # w_ref : (D, tn)   gamma-folded weight column block (native dtype)
    # b_ref : (1, tn)   beta-folded bias block (f32)
    # o_ref : (tr, tn)  output block
    # xn_ref: (tr, D)   VMEM scratch caching normalized rows (W's dtype)

    # LayerNorm only at the first column step: axis 1 is "arbitrary"
    # (sequential), so j == 0 runs before all j > 0 of the same row tile and
    # the scratch stays valid across the whole j loop.
    @pl.when(pl.program_id(1) == 0)
    def _():
        x = x_ref[...].astype(jnp.float32)
        mean = jnp.mean(x, axis=-1, keepdims=True)
        centered = x - mean
        var = jnp.mean(centered * centered, axis=-1, keepdims=True)
        xn = centered * jax.lax.rsqrt(var + LN_EPS)
        xn_ref[...] = xn.astype(xn_ref.dtype)

    # fn: Linear — MXU matmul, f32 accumulation.
    out = jnp.dot(xn_ref[...], w_ref[...], preferred_element_type=jnp.float32)
    o_ref[...] = (out + b_ref[...]).astype(o_ref.dtype)


def _round_up(x, m):
    return ((x + m - 1) // m) * m


def _vmem_cap_bytes():
    """~75% of physical VMEM; conservative (v7x-sized) fallback on failure."""
    try:
        info = pltpu.get_tpu_info()
        cap = getattr(info, "vmem_capacity_bytes", None)
        if not cap:
            cap = getattr(info, "vmem_bytes", None)
        if cap:
            return int(0.75 * int(cap))
    except Exception:
        pass
    return int(0.75 * (64 << 20))


def _vmem_estimate(tr, tn, d, x_bytes, w_bytes, o_bytes):
    return (2 * tr * d * x_bytes          # x tile, double-buffered
            + 2 * d * tn * w_bytes        # W block, double-buffered (conservative)
            + 2 * tn * 4                  # folded bias (f32)
            + 2 * tr * tn * o_bytes       # output tile, double-buffered
            + tr * d * w_bytes            # xn scratch
            + 3 * tr * d * 4              # transient f32 LN temps
            + tr * tn * 4)                # f32 matmul result before downcast


def _select_tiles(rows, d, x_bytes, w_bytes, o_bytes, cap, max_tile_rows):
    rows8 = _round_up(max(rows, 1), 8)
    tr_opts = [t for t in (512, 256, 128, 64, 32, 16, 8)
               if t <= max(max_tile_rows, 8) and t <= rows8]
    if not tr_opts:
        tr_opts = [rows8]

    # 1) Prefer a fully resident W (tile_n = D): W is DMA'd from HBM once for
    #    the whole kernel instead of once per row tile.
    for tr in tr_opts:
        if _vmem_estimate(tr, d, d, x_bytes, w_bytes, o_bytes) <= cap:
            return tr, d
    # 2) Column-tiled W: keep output lane-dense / MXU-friendly; shrink the row
    #    tile before shrinking tile_n below 512.
    for tn in (512, 256, 128):
        if tn > d:
            continue
        for tr in tr_opts:
            if _vmem_estimate(tr, tn, d, x_bytes, w_bytes, o_bytes) <= cap:
                return tr, tn
    # 3) Last resort: smallest tiles.
    return tr_opts[-1], min(d, 128)


@functools.partial(jax.jit, static_argnames=("tile_rows",))
def prenorm_linear(x, gamma, beta, w, b, *, tile_rows=512):
    """PreNorm with fn = Linear: Linear(LayerNorm(x)).  x: (B, S, D) -> (B, S, D)."""
    B, S, D = x.shape
    rows = B * S
    x2 = x.reshape(rows, D)

    # ---- Fold the LayerNorm affine (gamma, beta) into the linear layer ----
    # W' = diag(gamma) @ W, b' = beta @ W + b   (computed in f32).
    # Note: casting W' back to w.dtype re-rounds low-precision weights; the
    # error is within one bf16 ulp and negligible for typical gamma.
    w32 = w.astype(jnp.float32)
    w_folded = (gamma.astype(jnp.float32)[:, None] * w32).astype(w.dtype)
    b_folded = (beta.astype(jnp.float32) @ w32 + b.astype(jnp.float32)).reshape(1, D)

    # ---- Tile selection under a generation-aware VMEM cap ----
    cap = _vmem_cap_bytes()
    tr, tn = _select_tiles(rows, D, x2.dtype.itemsize, w_folded.dtype.itemsize,
                           x.dtype.itemsize, cap - (4 << 20), tile_rows)

    padded_rows = _round_up(rows, tr)
    if padded_rows != rows:
        x2 = jnp.pad(x2, ((0, padded_rows - rows), (0, 0)))

    padded_n = _round_up(D, tn)
    if padded_n != D:
        w_folded = jnp.pad(w_folded, ((0, 0), (0, padded_n - D)))
        b_folded = jnp.pad(b_folded, ((0, 0), (0, padded_n - D)))

    grid = (padded_rows // tr, padded_n // tn)

    needed = _vmem_estimate(tr, tn, D, x2.dtype.itemsize,
                            w_folded.dtype.itemsize, x.dtype.itemsize)
    vmem_limit = int(min(max(needed + (4 << 20), 32 << 20), cap))

    out = pl.pallas_call(
        _prenorm_linear_kernel,
        out_shape=jax.ShapeDtypeStruct((padded_rows, padded_n), x.dtype),
        grid_spec=pltpu.PrefetchScalarGridSpec(
            num_scalar_prefetch=0,
            grid=grid,
            in_specs=[
                pl.BlockSpec((tr, D), lambda i, j: (i, 0)),   # x rows (full D)
                pl.BlockSpec((D, tn), lambda i, j: (0, j)),   # W column block
                pl.BlockSpec((1, tn), lambda i, j: (0, j)),   # folded bias
            ],
            out_specs=pl.BlockSpec((tr, tn), lambda i, j: (i, j)),
            scratch_shapes=[pltpu.VMEM((tr, D), w_folded.dtype)],  # xn cache
        ),
        compiler_params=pltpu.CompilerParams(
            # Row tiles split across TensorCores (v7x); column axis must be
            # sequential so the xn scratch cache is valid.
            dimension_semantics=("parallel", "arbitrary"),
            vmem_limit_bytes=vmem_limit,
        ),
    )(x2, w_folded, b_folded)

    return out[:rows, :D].reshape(B, S, D)


def _reference(x, gamma, beta, w, b):
    xf = x.astype(jnp.float32)
    mean = jnp.mean(xf, axis=-1, keepdims=True)
    var = jnp.mean((xf - mean) ** 2, axis=-1, keepdims=True)
    xn = (xf - mean) / jnp.sqrt(var + LN_EPS)
    y = xn * gamma + beta
    return (y @ w.astype(jnp.float32) + b).astype(x.dtype)


if __name__ == "__main__":
    key = jax.random.PRNGKey(0)
    B, S, D = 2, 8, 32  # small demo shape; real d_model (>=512) is the target

    k_x, k_w, k_b = jax.random.split(key, 3)
    x = jax.random.normal(k_x, (B, S, D), dtype=jnp.float32)

    gamma = jnp.ones((D,), dtype=jnp.float32)
    beta = jnp.zeros((D,), dtype=jnp.float32)
    w = jax.random.normal(k_w, (D, D), dtype=jnp.float32) * (1.0 / math.sqrt(D))
    b = jax.random.normal(k_b, (D,), dtype=jnp.float32) * 0.01

    out = prenorm_linear(x, gamma, beta, w, b)
    out = jax.block_until_ready(out)

    ref = _reference(x, gamma, beta, w, b)
    assert out.shape == (B, S, D)
    assert jnp.allclose(out, ref, atol=1e-4, rtol=1e-4), "mismatch vs reference"

    print("KERNEL_OK")
</pallas_src>

<mosaic_0001>
module attributes {stable_mosaic.version = 11 : i64} {
  func.func @_prenorm_linear_kernel(%arg0: i32, %arg1: i32, %arg2: memref<16x32xf32, #tpu.memory_space<vmem>>, %arg3: memref<32x32xf32, #tpu.memory_space<vmem>>, %arg4: memref<1x32xf32, #tpu.memory_space<vmem>>, %arg5: memref<16x32xf32, #tpu.memory_space<vmem>>, %arg6: memref<16x32xf32, #tpu.memory_space<vmem>>) attributes {dimension_semantics = [#tpu.dimension_semantics<parallel>, #tpu.dimension_semantics<arbitrary>], iteration_bounds = array<i64: 1, 1>, scalar_prefetch = 0 : i64, scratch_operands = 1 : i64, tpu.core_type = #tpu.core_type<tc>, window_params = [{transform_indices = @transform_0, window_bounds = array<i64: 16, 32>}, {transform_indices = @transform_1, window_bounds = array<i64: 32, 32>}, {transform_indices = @transform_2, window_bounds = array<i64: 1, 32>}, {transform_indices = @transform_3, window_bounds = array<i64: 16, 32>}]} {
    %c0_i32 = arith.constant 0 : i32
    %0 = arith.cmpi eq, %arg1, %c0_i32 : i32
    %1 = arith.extui %0 : i1 to i32
    %c0_i32_0 = arith.constant 0 : i32
    %2 = arith.cmpi ne, %1, %c0_i32_0 : i32
    scf.if %2 {
      %c0_8 = arith.constant 0 : index
      %c0_9 = arith.constant 0 : index
      %10 = vector.load %arg2[%c0_8, %c0_9] : memref<16x32xf32, #tpu.memory_space<vmem>>, vector<16x32xf32>
      %cst_10 = arith.constant dense<0.000000e+00> : vector<16xf32>
      %11 = vector.multi_reduction <add>, %10, %cst_10 [1] : vector<16x32xf32> to vector<16xf32>
      %12 = vector.shape_cast %11 : vector<16xf32> to vector<16x1xf32>
      %cst_11 = arith.constant 3.200000e+01 : f32
      %13 = vector.broadcast %cst_11 : f32 to vector<16x1xf32>
      %14 = arith.divf %12, %13 : vector<16x1xf32>
      %15 = vector.broadcast %14 : vector<16x1xf32> to vector<16x32xf32>
      %16 = arith.subf %10, %15 : vector<16x32xf32>
      %17 = arith.mulf %16, %16 : vector<16x32xf32>
      %cst_12 = arith.constant dense<0.000000e+00> : vector<16xf32>
      %18 = vector.multi_reduction <add>, %17, %cst_12 [1] : vector<16x32xf32> to vector<16xf32>
      %19 = vector.shape_cast %18 : vector<16xf32> to vector<16x1xf32>
      %cst_13 = arith.constant 3.200000e+01 : f32
      %20 = vector.broadcast %cst_13 : f32 to vector<16x1xf32>
      %21 = arith.divf %19, %20 : vector<16x1xf32>
      %cst_14 = arith.constant 9.99999974E-6 : f32
      %22 = vector.broadcast %cst_14 : f32 to vector<16x1xf32>
      %23 = arith.addf %21, %22 : vector<16x1xf32>
      %24 = math.rsqrt %23 : vector<16x1xf32>
      %25 = vector.broadcast %24 : vector<16x1xf32> to vector<16x32xf32>
      %26 = arith.mulf %16, %25 : vector<16x32xf32>
      %c0_15 = arith.constant 0 : index
      %c0_16 = arith.constant 0 : index
      %27 = vector.load %arg6[%c0_15, %c0_16] : memref<16x32xf32, #tpu.memory_space<vmem>>, vector<16x32xf32>
      tpu.vector_store %arg6[%c0_15, %c0_16], %26 {strides = array<i32>} : memref<16x32xf32, #tpu.memory_space<vmem>>, vector<16x32xf32>,
    } else {
    }
    %c0 = arith.constant 0 : index
    %c0_1 = arith.constant 0 : index
    %3 = vector.load %arg6[%c0, %c0_1] : memref<16x32xf32, #tpu.memory_space<vmem>>, vector<16x32xf32>
    %c0_2 = arith.constant 0 : index
    %c0_3 = arith.constant 0 : index
    %4 = vector.load %arg3[%c0_2, %c0_3] : memref<32x32xf32, #tpu.memory_space<vmem>>, vector<32x32xf32>
    %cst = arith.constant dense<0.000000e+00> : vector<16x32xf32>
    %5 = tpu.matmul %3, %4, %cst {dimension_numbers = #tpu.dot_dimension_numbers<[1], [0], [0], [1], [0, 0, 1, 1], [], []>} : vector<16x32xf32>, vector<32x32xf32>, vector<16x32xf32> -> vector<16x32xf32>
    %c0_4 = arith.constant 0 : index
    %c0_5 = arith.constant 0 : index
    %6 = vector.load %arg4[%c0_4, %c0_5] : memref<1x32xf32, #tpu.memory_space<vmem>>, vector<1x32xf32>
    %7 = vector.broadcast %6 : vector<1x32xf32> to vector<16x32xf32>
    %8 = arith.addf %5, %7 : vector<16x32xf32>
    %c0_6 = arith.constant 0 : index
    %c0_7 = arith.constant 0 : index
    %9 = vector.load %arg5[%c0_6, %c0_7] : memref<16x32xf32, #tpu.memory_space<vmem>>, vector<16x32xf32>
    tpu.vector_store %arg5[%c0_6, %c0_7], %8 {strides = array<i32>} : memref<16x32xf32, #tpu.memory_space<vmem>>, vector<16x32xf32>,
    return
  }
  func.func @transform_0(%arg0: i32, %arg1: i32) -> (i32, i32) {
    %c0_i32 = arith.constant 0 : i32
    %c0_i32_0 = arith.constant 0 : i32
    return %arg0, %c0_i32 : i32, i32
  }
  func.func @transform_1(%arg0: i32, %arg1: i32) -> (i32, i32) {
    %c0_i32 = arith.constant 0 : i32
    %c0_i32_0 = arith.constant 0 : i32
    return %c0_i32, %arg1 : i32, i32
  }
  func.func @transform_2(%arg0: i32, %arg1: i32) -> (i32, i32) {
    %c0_i32 = arith.constant 0 : i32
    %c0_i32_0 = arith.constant 0 : i32
    return %c0_i32, %arg1 : i32, i32
  }
  func.func @transform_3(%arg0: i32, %arg1: i32) -> (i32, i32) {
    %c0_i32 = arith.constant 0 : i32
    return %arg0, %arg1 : i32, i32
  }
}

</mosaic_0001>

<llo_original>
// kernel: prenorm_linear.1
$region0: #{prenorm_linear.1}
  #allocation0 [shape = 'u32[]', space=smem, size = 0x4, offset = 0x4, fixed_abs, tag = 'smem constant byte address 0x4 - core index']
  #allocation1 [shape = 'u32[72,128]{1,0:T(1,128)}', space=vmem, size = 0x9000, scoped, tag = 'internal scratch']
  #allocation2 [shape = 'f32[16,32]{1,0:T(8,128)}', space=vmem, size = 0x2000, scoped, tag = 'scratch operand']
  %s0 = inlined_call_operand.vmem [shape: f32[16,32], index: 0, kind: input, shape index: {}]
  %s1 = inlined_call_operand.vmem [shape: f32[32,32], index: 1, kind: input, shape index: {}]
  %s2 = inlined_call_operand.vmem [shape: f32[1,32], index: 2, kind: input, shape index: {}]
  %s3 = inlined_call_operand.hbm [shape: f32[16,32], index: 3, kind: output, shape index: {}]
  %s4 = sld [smem:[#allocation0]]
  $region26: #{prenorm_linear.1} parent=0
    _
  %s6 = ssub.s32 1, %s4
  %s7 = scalar_select 0, %s6, %s4
  $region1: #{prenorm_linear.1} parent=0
    #allocation3 [shape = 'u8[8192]{0}', space=vmem, size = 0x2000, scoped, tag = 'output window, operand 0, single buffered']
    #allocation4 [shape = 's32[1]{0}', space=sflag, size = 0x4, scoped, tag = 'scoped memory for prenorm_linear.1']
    %8 = vsyncpa [#allocation4], 0
    // Predicated region
    $region2: #{prenorm_linear.1} parent=1 // pred_check
      _
    $region3: #{prenorm_linear.1} parent=1 // pred_check_branch
      %10 = sbr.rel (0) target = $region5
    $region4: #{prenorm_linear.1} parent=1 // pred_region
      _
    $region5: #{prenorm_linear.1} parent=1 // pred_fallthru
      _
    // Predicated region
    $region6: #{prenorm_linear.1} parent=1 // pred_check
      _
    $region7: #{prenorm_linear.1} parent=1 // pred_check_branch
      %12 = sbr.rel (0) target = $region9
    $region8: #{prenorm_linear.1} parent=1 // pred_region
      _
    $region9: #{prenorm_linear.1} parent=1 // pred_fallthru
      _
    // Predicated region
    $region10: #{prenorm_linear.1} parent=1 // pred_check
      _
    $region11: #{prenorm_linear.1} parent=1 // pred_check_branch
      %14 = sbr.rel (0) target = $region13
    $region12: #{prenorm_linear.1} parent=1 // pred_region
      _
    $region13: #{prenorm_linear.1} parent=1 // pred_fallthru
      _
    %p15 = scmp.eq.s32.totalorder 0, 0
    // Predicated region
    $region14: #{prenorm_linear.1} parent=1 // pred_check
      %p16 = pneg %p15
    $region15: #{prenorm_linear.1} parent=1 // pred_check_branch
      %18 = sbr.rel (%p16) target = $region17
    $region16: #{prenorm_linear.1} parent=1 // pred_region
      %v19 = vld [vmem:[%s0] sm:$0xff]
      %v20 = vld [vmem:[%s0 + $0x8] sm:$0xff]
      %vm21 = vcmask 261120
      %v22 = vsel %vm21, %v19, 0.0
      %23 = vadd.xlane.f32.xlu0 %v22
      %v24 = vpop.xlane.xlu0 %23
      %v25 = vsel %vm21, %v20, 0.0
      %26 = vadd.xlane.f32.xlu0 %v25
      %v27 = vpop.xlane.xlu0 %26
      %v28 = vrcp.pop 32.0
      %v29 = vmul.f32 32.0, %v28
      %v30 = vsub.f32 1.0, %v29
      %v31 = vmul.f32 %v28, %v30
      %v32 = vadd.f32 %v28, %v31
      %vm33 = vweird.f32 %v28
      %v34 = vsel %vm33, %v28, %v32
      %v35 = vmul.f32 %v24, %v34
      %v36 = vmul.f32 %v27, %v34
      %v37 = vsub.f32 %v19, %v35
      %v38 = vsub.f32 %v20, %v36
      %v39 = vmul.f32 %v37, %v37
      %v40 = vmul.f32 %v38, %v38
      %v41 = vsel %vm21, %v39, 0.0
      %42 = vadd.xlane.f32.xlu0 %v41
      %v43 = vpop.xlane.xlu0 %42
      %v44 = vsel %vm21, %v40, 0.0
      %45 = vadd.xlane.f32.xlu0 %v44
      %v46 = vpop.xlane.xlu0 %45
      %v47 = vmul.f32 %v43, %v34
      %v48 = vmul.f32 %v46, %v34
      %v49 = vadd.f32 %v47, 1e-05
      %v50 = vadd.f32 %v48, 1e-05
      %v51 = vrsqrt.pop %v49
      %v52 = vmul.f32 %v51, %v49
      %v53 = vmul.f32 %v52, %v51
      %v54 = vmul.f32 0.5, %v53
      %v55 = vsub.f32 1.5, %v54
      %v56 = vmul.f32 %v51, %v55
      %vm57 = vweird.f32 %v49
      %vm58 = vweird.f32 %v51
      %vm59 = vmor %vm57, %vm58
      %v60 = vsel %vm59, %v51, %v56
      %v61 = vrsqrt.pop %v50
      %v62 = vmul.f32 %v61, %v50
      %v63 = vmul.f32 %v62, %v61
      %v64 = vmul.f32 0.5, %v63
      %v65 = vsub.f32 1.5, %v64
      %v66 = vmul.f32 %v61, %v65
      %vm67 = vweird.f32 %v50
      %vm68 = vweird.f32 %v61
      %vm69 = vmor %vm67, %vm68
      %v70 = vsel %vm69, %v61, %v66
      %v71 = vmul.f32 %v37, %v60
      %v72 = vmul.f32 %v38, %v70
      %73 = vst.msk [vmem:[#allocation2] sm:$0xff] %vm21, %v71
      %74 = vst.msk [vmem:[#allocation2 + $0x8] sm:$0xff] %vm21, %v72
    $region17: #{prenorm_linear.1} parent=1 // pred_fallthru
      _
    %v75 = vld [vmem:[#allocation2] sm:$0xff]
    %v76 = vld [vmem:[#allocation2 + $0x8] sm:$0xff]
    %v77 = vld [vmem:[%s1] sm:$0xff]
    %v78 = vld [vmem:[%s1 + $0x8] sm:$0xff]
    %v79 = vld [vmem:[%s1 + $0x10] sm:$0xff]
    %v80 = vld [vmem:[%s1 + $0x18] sm:$0xff]
    %v81 = vld [vmem:[%s2] sm:$0x1]
    %v83 = vperm.slane %v81, 0
    %vm85 = vcmask 261120
    %v87 = vsel %vm85, %v75, 0
    %v90 = vsel %vm85, %v76, 0
    %92 = vmatpush.msra.mxu0 0.0
    %93 = vmatpush.msra.mxu0 0.0
    %94 = vmatpush.msra.mxu0 0.0
    %95 = vmatpush.msra.mxu0 0.0
    %96 = vmatpush.msra.mxu0 0.0
    %97 = vmatpush.msra.mxu0 0.0
    %98 = vmatpush.msra.mxu0 0.0
    %99 = vmatpush.msra.mxu0 0.0
    %100 = vmatpush.msra.mxu0 0.0
    %101 = vmatpush.msra.mxu0 0.0
    %102 = vmatpush.msra.mxu0 0.0
    %103 = vmatpush.msra.mxu0 0.0
    %104 = vmatpush.msra.mxu0 %v80
    %105 = vmatpush.msra.mxu0 %v79
    %106 = vmatpush.msra.mxu0 %v78
    %107 = vmatpush.msra.mxu0 %v77
    %108 = vmatmul.f32.gmra.mxu0 %v87
    %v109 = vpop.f32.mrf.mxu0
    %v110 = vadd.f32 %v83, %v109
    %111 = vmatmul.f32.gmra.mxu0 %v90
    %v112 = vpop.f32.mrf.mxu0
    %v113 = vadd.f32 %v83, %v112
    %114 = vdwg.mxu0
    %115 = vst.msk [vmem:[#allocation3] sm:$0xff] %vm85, %v110
    %116 = vst.msk [vmem:[#allocation3 + $0x8] sm:$0xff] %vm85, %v113
    // Predicated region
    $region18: #{prenorm_linear.1} parent=1 // pred_check
      _
    $region19: #{prenorm_linear.1} parent=1 // pred_check_branch
      %118 = sbr.rel (0) target = $region21
    $region20: #{prenorm_linear.1} parent=1 // pred_region
      %120 = vsyncadd [#allocation4], 0
      %s121 = sshll.u32 [#allocation3], 4
      %s122 = int_to_ptr.vmem [resolvable:$true] %s121
      %s123 = sshll.u32 %s3, 4
      %s124 = int_to_ptr.hbm [resolvable:$true] %s123
      %129 = dma.vmem_to_hbm [thread:$0]  %s122, 256, %s124, [#allocation4], 128, 128, 8
    $region21: #{prenorm_linear.1} parent=1 // pred_fallthru
      _
    // Predicated region
    $region22: #{prenorm_linear.1} parent=1 // pred_check
      _
    $region23: #{prenorm_linear.1} parent=1 // pred_check_branch
      %131 = sbr.rel (0) target = $region25
    $region24: #{prenorm_linear.1} parent=1 // pred_region
      %133 = dma.done [#allocation4], 256
    $region25: #{prenorm_linear.1} parent=1 // pred_fallthru
      _
    %134 = vsyncpa [#allocation4], 1

</llo_original>
